<compile_context>
chip_gen: v7x
topology: tpu7x:2x2x1
jax: 0.10.0
libtpu: 0.0.40
codegen_flags: <defaults>
</compile_context>

<pallas_src>
import jax
import jax.numpy as jnp
from jax.experimental import pallas as pl
from jax.experimental.pallas import tpu as pltpu

LANES = 128
MAX_TILE_ROWS = 2048   # (2048,128) f32 block = 1 MiB per stream buffer
NUM_CHUNKS = 2         # megacore split (v7x); harmless serial loop on v5e/v6e


def _bce_partials_kernel(x_ref, t_ref, acc_ref):
    """Accumulates (8,128) partials of [num_pos, num_neg, sum(pos*bce), sum(neg*bce)].

    acc_ref block: (4, 8, LANES) f32, resident across the reduction grid axis.
    """
    i = pl.program_id(1)

    @pl.when(i == 0)
    def _():
        acc_ref[...] = jnp.zeros_like(acc_ref)

    x = x_ref[...].astype(jnp.float32)
    t = t_ref[...].astype(jnp.float32)

    pos = (t == 1.0).astype(jnp.float32)
    neg = (t == 0.0).astype(jnp.float32)

    # Numerically stable BCE-with-logits: max(x,0) - x*t + log1p(exp(-|x|)).
    bce = jnp.maximum(x, 0.0) - x * t + jnp.log1p(jnp.exp(-jnp.abs(x)))

    def fold(v):
        # (tile_rows, 128) -> (8, 128): pure vreg adds on the VPU,
        # no per-step cross-lane (XLU) reduction and no SMEM scalar chain.
        return v.reshape(-1, 8, LANES).sum(axis=0)

    acc_ref[0] += fold(pos)
    acc_ref[1] += fold(neg)
    acc_ref[2] += fold(pos * bce)
    acc_ref[3] += fold(neg * bce)


@jax.jit
def bce_loss(logits, target):
    """JAX/Pallas equivalent of BCELoss.forward(input, target)."""
    assert logits.shape == target.shape
    n = logits.size

    rows_needed = pl.cdiv(n, LANES)
    tile_rows = min(MAX_TILE_ROWS, pl.cdiv(rows_needed, 8 * NUM_CHUNKS) * 8)
    rows = pl.cdiv(rows_needed, tile_rows * NUM_CHUNKS) * tile_rows * NUM_CHUNKS
    steps = rows // (tile_rows * NUM_CHUNKS)
    pad = rows * LANES - n

    x_flat = logits.reshape(-1)
    t_flat = target.reshape(-1)
    if pad:
        # Pad target with 2.0 (neither 0 nor 1) so padded elements get weight 0
        # exactly -> no validity-mask stream needed.
        # TODO(synk): for very large unaligned inputs, pad only the final tile
        # instead of materializing a full padded copy in HBM.
        x_flat = jnp.pad(x_flat, (0, pad))
        t_flat = jnp.pad(t_flat, (0, pad), constant_values=2.0)

    x2 = x_flat.reshape(rows, LANES)
    t2 = t_flat.reshape(rows, LANES)

    in_spec = pl.BlockSpec((tile_rows, LANES), lambda c, i: (c * steps + i, 0))

    partial_blocks = pl.pallas_call(
        _bce_partials_kernel,
        out_shape=jax.ShapeDtypeStruct((NUM_CHUNKS, 4, 8, LANES), jnp.float32),
        grid_spec=pltpu.PrefetchScalarGridSpec(
            num_scalar_prefetch=0,
            grid=(NUM_CHUNKS, steps),
            in_specs=[in_spec, in_spec],
            out_specs=pl.BlockSpec((None, 4, 8, LANES), lambda c, i: (c, 0, 0, 0)),
        ),
        compiler_params=pltpu.CompilerParams(
            dimension_semantics=("parallel", "arbitrary"),
        ),
        cost_estimate=pl.CostEstimate(
            flops=12 * n,
            transcendentals=2 * n,
            bytes_accessed=2 * 4 * n,
        ),
    )(x2, t2)

    sums = jnp.sum(partial_blocks, axis=(0, 2, 3))   # (4,) tiny epilogue reduce
    num_pos, num_neg = sums[0], sums[1]
    sum_pos_bce, sum_neg_bce = sums[2], sums[3]

    num_total = num_pos + num_neg
    alpha = num_neg / num_total
    beta = 1.1 * num_pos / num_total
    return (alpha * sum_pos_bce + beta * sum_neg_bce) / n


def _reference(logits, target):
    x = logits.astype(jnp.float32)
    t = target.astype(jnp.float32)
    pos = (t == 1.0).astype(jnp.float32)
    neg = (t == 0.0).astype(jnp.float32)
    num_pos = jnp.sum(pos)
    num_neg = jnp.sum(neg)
    num_total = num_pos + num_neg
    alpha = num_neg / num_total
    beta = 1.1 * num_pos / num_total
    w = alpha * pos + beta * neg
    bce = jnp.maximum(x, 0.0) - x * t + jnp.log1p(jnp.exp(-jnp.abs(x)))
    return jnp.mean(w * bce)


if __name__ == "__main__":
    key = jax.random.PRNGKey(0)
    k1, k2 = jax.random.split(key)

    # NCHW, as the PyTorch module would receive: logits + binary {0,1} target.
    logits = jax.random.normal(k1, (2, 4, 16, 16), dtype=jnp.float32)
    target = (jax.random.uniform(k2, (2, 4, 16, 16)) > 0.5).astype(jnp.float32)

    loss = bce_loss(logits, target)
    jax.block_until_ready(loss)

    ref = _reference(logits, target)
    assert jnp.allclose(loss, ref, atol=1e-5, rtol=1e-5), (loss, ref)

    print("KERNEL_OK")
</pallas_src>

<mosaic_0001>
module attributes {stable_mosaic.version = 11 : i64} {
  func.func @_bce_partials_kernel(%arg0: i32, %arg1: i32, %arg2: memref<8x128xf32, #tpu.memory_space<vmem>>, %arg3: memref<8x128xf32, #tpu.memory_space<vmem>>, %arg4: memref<1x4x8x128xf32, #tpu.memory_space<vmem>>) attributes {dimension_semantics = [#tpu.dimension_semantics<parallel>, #tpu.dimension_semantics<arbitrary>], iteration_bounds = array<i64: 2, 1>, scalar_prefetch = 0 : i64, scratch_operands = 0 : i64, tpu.core_type = #tpu.core_type<tc>, window_params = [{transform_indices = @transform_0, window_bounds = array<i64: 8, 128>}, {transform_indices = @transform_1, window_bounds = array<i64: 8, 128>}, {transform_indices = @transform_2, window_bounds = array<i64: 1, 4, 8, 128>}]} {
    %c0_i32 = arith.constant 0 : i32
    %0 = arith.cmpi eq, %arg1, %c0_i32 : i32
    %1 = arith.extui %0 : i1 to i32
    %c0_i32_0 = arith.constant 0 : i32
    %2 = arith.cmpi ne, %1, %c0_i32_0 : i32
    scf.if %2 {
      %cst_40 = arith.constant 0.000000e+00 : f32
      %57 = vector.broadcast %cst_40 : f32 to vector<4x8x128xf32>
      %c0_41 = arith.constant 0 : index
      %c0_42 = arith.constant 0 : index
      %c0_43 = arith.constant 0 : index
      %c0_44 = arith.constant 0 : index
      %58 = vector.load %arg4[%c0_41, %c0_42, %c0_43, %c0_44] : memref<1x4x8x128xf32, #tpu.memory_space<vmem>>, vector<1x4x8x128xf32>
      %59 = vector.shape_cast %58 : vector<1x4x8x128xf32> to vector<4x8x128xf32>
      %60 = vector.shape_cast %57 : vector<4x8x128xf32> to vector<1x4x8x128xf32>
      tpu.vector_store %arg4[%c0_41, %c0_42, %c0_43, %c0_44], %60 {strides = array<i32>} : memref<1x4x8x128xf32, #tpu.memory_space<vmem>>, vector<1x4x8x128xf32>,
    } else {
    }
    %c0 = arith.constant 0 : index
    %c0_1 = arith.constant 0 : index
    %3 = vector.load %arg2[%c0, %c0_1] : memref<8x128xf32, #tpu.memory_space<vmem>>, vector<8x128xf32>
    %c0_2 = arith.constant 0 : index
    %c0_3 = arith.constant 0 : index
    %4 = vector.load %arg3[%c0_2, %c0_3] : memref<8x128xf32, #tpu.memory_space<vmem>>, vector<8x128xf32>
    %cst = arith.constant 1.000000e+00 : f32
    %5 = vector.broadcast %cst : f32 to vector<8x128xf32>
    %6 = arith.cmpf oeq, %4, %5 : vector<8x128xf32>
    %7 = arith.extui %6 : vector<8x128xi1> to vector<8x128xi32>
    %8 = arith.sitofp %7 : vector<8x128xi32> to vector<8x128xf32>
    %cst_4 = arith.constant 0.000000e+00 : f32
    %9 = vector.broadcast %cst_4 : f32 to vector<8x128xf32>
    %10 = arith.cmpf oeq, %4, %9 : vector<8x128xf32>
    %11 = arith.extui %10 : vector<8x128xi1> to vector<8x128xi32>
    %12 = arith.sitofp %11 : vector<8x128xi32> to vector<8x128xf32>
    %cst_5 = arith.constant 0.000000e+00 : f32
    %13 = vector.broadcast %cst_5 : f32 to vector<8x128xf32>
    %14 = arith.maximumf %3, %13 : vector<8x128xf32>
    %15 = arith.mulf %3, %4 : vector<8x128xf32>
    %16 = arith.subf %14, %15 : vector<8x128xf32>
    %17 = math.absf %3 : vector<8x128xf32>
    %cst_6 = arith.constant 0.000000e+00 : f32
    %18 = vector.broadcast %cst_6 : f32 to vector<8x128xf32>
    %19 = arith.subf %18, %17 : vector<8x128xf32>
    %20 = math.exp %19 : vector<8x128xf32>
    %21 = math.log1p %20 : vector<8x128xf32>
    %22 = arith.addf %16, %21 : vector<8x128xf32>
    %c0_7 = arith.constant 0 : index
    %c0_8 = arith.constant 0 : index
    %c0_9 = arith.constant 0 : index
    %c0_10 = arith.constant 0 : index
    %23 = vector.load %arg4[%c0_7, %c0_8, %c0_9, %c0_10] : memref<1x4x8x128xf32, #tpu.memory_space<vmem>>, vector<1x1x8x128xf32>
    %24 = vector.shape_cast %23 : vector<1x1x8x128xf32> to vector<8x128xf32>
    %25 = vector.shape_cast %8 : vector<8x128xf32> to vector<1x8x128xf32>
    %cst_11 = arith.constant dense<0.000000e+00> : vector<8x128xf32>
    %26 = vector.multi_reduction <add>, %25, %cst_11 [0] : vector<1x8x128xf32> to vector<8x128xf32>
    %27 = arith.addf %24, %26 : vector<8x128xf32>
    %c0_12 = arith.constant 0 : index
    %c0_13 = arith.constant 0 : index
    %c0_14 = arith.constant 0 : index
    %c0_15 = arith.constant 0 : index
    %28 = vector.load %arg4[%c0_12, %c0_13, %c0_14, %c0_15] : memref<1x4x8x128xf32, #tpu.memory_space<vmem>>, vector<1x1x8x128xf32>
    %29 = vector.shape_cast %28 : vector<1x1x8x128xf32> to vector<8x128xf32>
    %30 = vector.shape_cast %27 : vector<8x128xf32> to vector<1x1x8x128xf32>
    tpu.vector_store %arg4[%c0_12, %c0_13, %c0_14, %c0_15], %30 {strides = array<i32>} : memref<1x4x8x128xf32, #tpu.memory_space<vmem>>, vector<1x1x8x128xf32>,
    %c0_16 = arith.constant 0 : index
    %c1 = arith.constant 1 : index
    %c0_17 = arith.constant 0 : index
    %c0_18 = arith.constant 0 : index
    %31 = vector.load %arg4[%c0_16, %c1, %c0_17, %c0_18] : memref<1x4x8x128xf32, #tpu.memory_space<vmem>>, vector<1x1x8x128xf32>
    %32 = vector.shape_cast %31 : vector<1x1x8x128xf32> to vector<8x128xf32>
    %33 = vector.shape_cast %12 : vector<8x128xf32> to vector<1x8x128xf32>
    %cst_19 = arith.constant dense<0.000000e+00> : vector<8x128xf32>
    %34 = vector.multi_reduction <add>, %33, %cst_19 [0] : vector<1x8x128xf32> to vector<8x128xf32>
    %35 = arith.addf %32, %34 : vector<8x128xf32>
    %c0_20 = arith.constant 0 : index
    %c1_21 = arith.constant 1 : index
    %c0_22 = arith.constant 0 : index
    %c0_23 = arith.constant 0 : index
    %36 = vector.load %arg4[%c0_20, %c1_21, %c0_22, %c0_23] : memref<1x4x8x128xf32, #tpu.memory_space<vmem>>, vector<1x1x8x128xf32>
    %37 = vector.shape_cast %36 : vector<1x1x8x128xf32> to vector<8x128xf32>
    %38 = vector.shape_cast %35 : vector<8x128xf32> to vector<1x1x8x128xf32>
    tpu.vector_store %arg4[%c0_20, %c1_21, %c0_22, %c0_23], %38 {strides = array<i32>} : memref<1x4x8x128xf32, #tpu.memory_space<vmem>>, vector<1x1x8x128xf32>,
    %c0_24 = arith.constant 0 : index
    %c2 = arith.constant 2 : index
    %c0_25 = arith.constant 0 : index
    %c0_26 = arith.constant 0 : index
    %39 = vector.load %arg4[%c0_24, %c2, %c0_25, %c0_26] : memref<1x4x8x128xf32, #tpu.memory_space<vmem>>, vector<1x1x8x128xf32>
    %40 = vector.shape_cast %39 : vector<1x1x8x128xf32> to vector<8x128xf32>
    %41 = arith.mulf %8, %22 : vector<8x128xf32>
    %42 = vector.shape_cast %41 : vector<8x128xf32> to vector<1x8x128xf32>
    %cst_27 = arith.constant dense<0.000000e+00> : vector<8x128xf32>
    %43 = vector.multi_reduction <add>, %42, %cst_27 [0] : vector<1x8x128xf32> to vector<8x128xf32>
    %44 = arith.addf %40, %43 : vector<8x128xf32>
    %c0_28 = arith.constant 0 : index
    %c2_29 = arith.constant 2 : index
    %c0_30 = arith.constant 0 : index
    %c0_31 = arith.constant 0 : index
    %45 = vector.load %arg4[%c0_28, %c2_29, %c0_30, %c0_31] : memref<1x4x8x128xf32, #tpu.memory_space<vmem>>, vector<1x1x8x128xf32>
    %46 = vector.shape_cast %45 : vector<1x1x8x128xf32> to vector<8x128xf32>
    %47 = vector.shape_cast %44 : vector<8x128xf32> to vector<1x1x8x128xf32>
    tpu.vector_store %arg4[%c0_28, %c2_29, %c0_30, %c0_31], %47 {strides = array<i32>} : memref<1x4x8x128xf32, #tpu.memory_space<vmem>>, vector<1x1x8x128xf32>,
    %c0_32 = arith.constant 0 : index
    %c3 = arith.constant 3 : index
    %c0_33 = arith.constant 0 : index
    %c0_34 = arith.constant 0 : index
    %48 = vector.load %arg4[%c0_32, %c3, %c0_33, %c0_34] : memref<1x4x8x128xf32, #tpu.memory_space<vmem>>, vector<1x1x8x128xf32>
    %49 = vector.shape_cast %48 : vector<1x1x8x128xf32> to vector<8x128xf32>
    %50 = arith.mulf %12, %22 : vector<8x128xf32>
    %51 = vector.shape_cast %50 : vector<8x128xf32> to vector<1x8x128xf32>
    %cst_35 = arith.constant dense<0.000000e+00> : vector<8x128xf32>
    %52 = vector.multi_reduction <add>, %51, %cst_35 [0] : vector<1x8x128xf32> to vector<8x128xf32>
    %53 = arith.addf %49, %52 : vector<8x128xf32>
    %c0_36 = arith.constant 0 : index
    %c3_37 = arith.constant 3 : index
    %c0_38 = arith.constant 0 : index
    %c0_39 = arith.constant 0 : index
    %54 = vector.load %arg4[%c0_36, %c3_37, %c0_38, %c0_39] : memref<1x4x8x128xf32, #tpu.memory_space<vmem>>, vector<1x1x8x128xf32>
    %55 = vector.shape_cast %54 : vector<1x1x8x128xf32> to vector<8x128xf32>
    %56 = vector.shape_cast %53 : vector<8x128xf32> to vector<1x1x8x128xf32>
    tpu.vector_store %arg4[%c0_36, %c3_37, %c0_38, %c0_39], %56 {strides = array<i32>} : memref<1x4x8x128xf32, #tpu.memory_space<vmem>>, vector<1x1x8x128xf32>,
    return
  }
  func.func @transform_0(%arg0: i32, %arg1: i32) -> (i32, i32) {
    %c1_i32 = arith.constant 1 : i32
    %0 = arith.muli %arg0, %c1_i32 : i32
    %1 = arith.addi %0, %arg1 : i32
    %c0_i32 = arith.constant 0 : i32
    %c0_i32_0 = arith.constant 0 : i32
    return %1, %c0_i32 : i32, i32
  }
  func.func @transform_1(%arg0: i32, %arg1: i32) -> (i32, i32) {
    %c1_i32 = arith.constant 1 : i32
    %0 = arith.muli %arg0, %c1_i32 : i32
    %1 = arith.addi %0, %arg1 : i32
    %c0_i32 = arith.constant 0 : i32
    %c0_i32_0 = arith.constant 0 : i32
    return %1, %c0_i32 : i32, i32
  }
  func.func @transform_2(%arg0: i32, %arg1: i32) -> (i32, i32, i32, i32) {
    %c0_i32 = arith.constant 0 : i32
    %c0_i32_0 = arith.constant 0 : i32
    %c0_i32_1 = arith.constant 0 : i32
    %c0_i32_2 = arith.constant 0 : i32
    return %arg0, %c0_i32, %c0_i32_0, %c0_i32_1 : i32, i32, i32, i32
  }
}

</mosaic_0001>

<llo_original>
// kernel: bce_loss.1
$region0: #{bce_loss.1}
  #allocation0 [shape = 'u32[]', space=smem, size = 0x4, offset = 0x4, fixed_abs, tag = 'smem constant byte address 0x4 - core index']
  #allocation1 [shape = 'u32[144,128]{1,0:T(1,128)}', space=vmem, size = 0x12000, scoped, tag = 'internal scratch']
  %s0 = inlined_call_operand.vmem [shape: f32[16,128], index: 0, kind: input, shape index: {}]
  %s1 = inlined_call_operand.vmem [shape: f32[16,128], index: 1, kind: input, shape index: {}]
  %s2 = inlined_call_operand.vmem [shape: f32[2,4,8,128], index: 2, kind: output, shape index: {}]
  %s3 = sld [smem:[#allocation0]]
  $region45: #{bce_loss.1} parent=0
    _
  %s5 = ssub.s32 1, %s3
  %s6 = scalar_select 0, %s5, %s3
  loop: start=0, step=1, limit=4
  $region2: #{bce_loss.1} parent=0 // loop_pre_header
    _
  $region3: #{bce_loss.1} parent=0 // loop_header
    %s8 = sphi 0, %s12
    %p9 = scmp.ge.s32.totalorder %s8, 4
    %s15 = sphi 0, %s27
    %s16 = sphi 0, %s23
    %s17 = sphi 0, %s15
    %s18 = sphi 0, %s16
    %s19 = sphi 0, %s17
    %s20 = sphi 0, %s18
    %s32 = sphi 0, %s34
    %s35 = sphi 0, %s32
    %s36 = sphi 0, %s35
    %s52 = sphi 0, %s36
    %s60 = sphi 0, %s62
    %s63 = sphi 0, %s60
    %s64 = sphi 0, %s63
    %s80 = sphi 0, %s64
    %s86 = sphi 0, %s88
    %s89 = sphi 0, %s86
    %s90 = sphi 0, %s89
    %s106 = sphi 0, %s90
  $region4: #{bce_loss.1} parent=0 // loop_header_branch
    %11 = sbr.rel (%p9) target = $region8
  $region5: #{bce_loss.1} parent=0 // loop_body
    %s13 = ssub.s32 %s8, 1
    %s14 = ssub.s32 %s8, 2
    %s21 = sadd.s32 1, %s16
    %p22 = scmp.ge.s32.totalorder %s21, 1
    %s23 = scalar_select %p22, 0, %s21
    %s24 = sadd.s32 1, %s15
    %s25 = scalar_select %p22, %s24, %s15
    %p26 = scmp.ge.s32.totalorder %s25, 2
    %s27 = scalar_select %p26, 0, %s25
    %s28 = sadd.s32 %s15, %s16
    %s29 = sadd.s32 %s27, %s23
    %s30 = ssub.s32 %s28, %s29
    %p31 = scmp.eq.s32.totalorder %s30, 0
    %s33 = sadd.s32 %s32, 1
    %s34 = scalar_select %p31, %s32, %s33
    %p37 = pneg %p31
    %p38 = scmp.eq.s32.totalorder %s8, 1
    %p39 = por %p37, %p38
    %p40 = scmp.ne.s32.totalorder %s32, %s35
    %p41 = scmp.eq.s32.totalorder %s8, 0
    %p42 = por %p40, %p41
    %p43 = scmp.ne.s32.totalorder %s32, %s35
    %p44 = scmp.eq.s32.totalorder %s13, 1
    %p45 = por %p43, %p44
    %p46 = scmp.ne.s32.totalorder %s35, %s36
    %p47 = scmp.eq.s32.totalorder %s13, 0
    %p48 = por %p46, %p47
    %p49 = scmp.ne.s32.totalorder %s35, %s36
    %p50 = scmp.eq.s32.totalorder %s14, 1
    %p51 = por %p49, %p50
    %p53 = scmp.ne.s32.totalorder %s36, %s52
    %p54 = scmp.eq.s32.totalorder %s14, 0
    %p55 = por %p53, %p54
    %s56 = sadd.s32 %s15, %s16
    %s57 = sadd.s32 %s27, %s23
    %s58 = ssub.s32 %s56, %s57
    %p59 = scmp.eq.s32.totalorder %s58, 0
    %s61 = sadd.s32 %s60, 1
    %s62 = scalar_select %p59, %s60, %s61
    %p65 = pneg %p59
    %p66 = scmp.eq.s32.totalorder %s8, 1
    %p67 = por %p65, %p66
    %p68 = scmp.ne.s32.totalorder %s60, %s63
    %p69 = scmp.eq.s32.totalorder %s8, 0
    %p70 = por %p68, %p69
    %p71 = scmp.ne.s32.totalorder %s60, %s63
    %p72 = scmp.eq.s32.totalorder %s13, 1
    %p73 = por %p71, %p72
    %p74 = scmp.ne.s32.totalorder %s63, %s64
    %p75 = scmp.eq.s32.totalorder %s13, 0
    %p76 = por %p74, %p75
    %p77 = scmp.ne.s32.totalorder %s63, %s64
    %p78 = scmp.eq.s32.totalorder %s14, 1
    %p79 = por %p77, %p78
    %p81 = scmp.ne.s32.totalorder %s64, %s80
    %p82 = scmp.eq.s32.totalorder %s14, 0
    %p83 = por %p81, %p82
    %s84 = ssub.s32 %s15, %s27
    %p85 = scmp.eq.s32.totalorder %s84, 0
    %s87 = sadd.s32 %s86, 1
    %s88 = scalar_select %p85, %s86, %s87
    %p91 = pneg %p85
    %p92 = scmp.eq.s32.totalorder %s8, 1
    %p93 = por %p91, %p92
    %p94 = scmp.ne.s32.totalorder %s86, %s89
    %p95 = scmp.eq.s32.totalorder %s8, 0
    %p96 = por %p94, %p95
    %p97 = scmp.ne.s32.totalorder %s86, %s89
    %p98 = scmp.eq.s32.totalorder %s13, 1
    %p99 = por %p97, %p98
    %p100 = scmp.ne.s32.totalorder %s89, %s90
    %p101 = scmp.eq.s32.totalorder %s13, 0
    %p102 = por %p100, %p101
    %p103 = scmp.ne.s32.totalorder %s89, %s90
    %p104 = scmp.eq.s32.totalorder %s14, 1
    %p105 = por %p103, %p104
    %p107 = scmp.ne.s32.totalorder %s90, %s106
    %p108 = scmp.eq.s32.totalorder %s14, 0
    %p109 = por %p107, %p108
    %p110 = scmp.le.s32.totalorder 1, %s8
    %p111 = scmp.lt.s32.totalorder %s8, 3
    %p112 = pnand %p110, %p111
    %p113 = pneg %p112
    // Predicated region
    $region9: #{bce_loss.1} parent=5 // pred_check
      _
    $region10: #{bce_loss.1} parent=5 // pred_check_branch
      %115 = sbr.rel (%p112) target = $region12
    $region11: #{bce_loss.1} parent=5 // pred_region
      %s116 = ssub.s32 %s8, 1
    $region12: #{bce_loss.1} parent=5 // pred_fallthru
      _
    %p117 = scmp.lt.s32.totalorder %s8, 2
    // Predicated region
    $region13: #{bce_loss.1} parent=5 // pred_check
      %p118 = pneg %p117
    $region14: #{bce_loss.1} parent=5 // pred_check_branch
      %120 = sbr.rel (%p118) target = $region16
    $region15: #{bce_loss.1} parent=5 // pred_region
      // Predicated region
      $region17: #{bce_loss.1} parent=15 // pred_check
        %p121 = pneg %p42
      $region18: #{bce_loss.1} parent=15 // pred_check_branch
        %123 = sbr.rel (%p121) target = $region20
      $region19: #{bce_loss.1} parent=15 // pred_region
        %s124 = sadd.s32 %s15, %s16
        %p125 = scmp.lt.s32.totalorder %s124, 1
        %s126 = scalar_select %p125, %s124, 1
        %s127 = smul.addr %s126, 8
        %s128 = scalar_lea.vmem %s0, %s127
        %s129 = sadd.s32 %s15, %s16
      $region20: #{bce_loss.1} parent=15 // pred_fallthru
        _
      // Predicated region
      $region21: #{bce_loss.1} parent=15 // pred_check
        %p130 = pneg %p70
      $region22: #{bce_loss.1} parent=15 // pred_check_branch
        %132 = sbr.rel (%p130) target = $region24
      $region23: #{bce_loss.1} parent=15 // pred_region
        %s133 = sadd.s32 %s15, %s16
        %p134 = scmp.lt.s32.totalorder %s133, 1
        %s135 = scalar_select %p134, %s133, 1
        %s136 = smul.addr %s135, 8
        %s137 = scalar_lea.vmem %s1, %s136
        %s138 = sadd.s32 %s15, %s16
      $region24: #{bce_loss.1} parent=15 // pred_fallthru
        _
    $region16: #{bce_loss.1} parent=5 // pred_fallthru
      _
    %p139 = scmp.le.s32.totalorder 1, %s8
    %p140 = scmp.lt.s32.totalorder %s8, 3
    %p141 = pnand %p139, %p140
    %p142 = pneg %p141
    // Predicated region
    $region25: #{bce_loss.1} parent=5 // pred_check
      _
    $region26: #{bce_loss.1} parent=5 // pred_check_branch
      %144 = sbr.rel (%p141) target = $region28
    $region27: #{bce_loss.1} parent=5 // pred_region
      %s145 = ssub.s32 %s8, 1
      %s146 = sadd.s32 %s17, %s18
      %p147 = scmp.lt.s32.totalorder %s146, 1
      %s148 = scalar_select %p147, %s146, 1
      %s149 = smul.addr %s148, 8
      %s150 = scalar_lea.vmem %s0, %s149
      %p151 = pneg %p48
      %p152 = pneg %p45
      %s153 = sadd.s32 %s17, %s18
      %p154 = scmp.lt.s32.totalorder %s153, 1
      %s155 = scalar_select %p154, %s153, 1
      %s156 = smul.addr %s155, 8
      %s157 = scalar_lea.vmem %s1, %s156
      %p158 = pneg %p76
      %p159 = pneg %p73
      %p160 = pneg %p102
      %p161 = pneg %p99
      %p162 = scmp.lt.s32.totalorder %s17, 1
      %s163 = scalar_select %p162, %s17, 1
      %s164 = smul.addr %s163, 4
      %s165 = smul.addr %s164, 8
      %s166 = scalar_lea.vmem %s2, %s165
      %s167 = sadd.s32 %s17, %s18
      %p168 = scmp.lt.s32.totalorder %s167, 1
      %s169 = scalar_select %p168, %s167, 1
      %s170 = smul.addr %s169, 8
      %s171 = scalar_lea.vmem %s0, %s170
      %s172 = sadd.s32 %s17, %s18
      %s173 = sadd.s32 %s17, %s18
      %p174 = scmp.lt.s32.totalorder %s173, 1
      %s175 = scalar_select %p174, %s173, 1
      %s176 = smul.addr %s175, 8
      %s177 = scalar_lea.vmem %s1, %s176
      %s178 = sadd.s32 %s17, %s18
      %p179 = scmp.lt.s32.totalorder %s17, 1
      %s180 = scalar_select %p179, %s17, 1
      %s181 = smul.addr %s180, 4
      %s182 = smul.addr %s181, 8
      %s183 = scalar_lea.vmem %s2, %s182
      %p184 = scmp.eq.s32.totalorder %s18, 0
      // Predicated region
      $region29: #{bce_loss.1} parent=27 // pred_check
        %p185 = pneg %p184
      $region30: #{bce_loss.1} parent=27 // pred_check_branch
        %187 = sbr.rel (%p185) target = $region32
      $region31: #{bce_loss.1} parent=27 // pred_region
        %188 = vst [vmem:[%s183] sm:$0xff] 0.0
        %189 = vst [vmem:[%s183 + $0x8] sm:$0xff] 0.0
        %190 = vst [vmem:[%s183 + $0x10] sm:$0xff] 0.0
        %191 = vst [vmem:[%s183 + $0x18] sm:$0xff] 0.0
      $region32: #{bce_loss.1} parent=27 // pred_fallthru
        _
      %v192 = vld [vmem:[%s171] sm:$0xff]
      %v193 = vld [vmem:[%s177] sm:$0xff]
      %vm194 = vcmp.eq.f32.partialorder %v193, 1.0
      %v195 = vsel %vm194, 1, 0
      %v196 = vcvt.s32.f32 %v195
      %vm197 = vcmp.eq.f32.partialorder %v193, 0.0
      %v198 = vsel %vm197, 1, 0
      %v199 = vcvt.s32.f32 %v198
      %v200 = vmax.f32 %v192, 0.0
      %v201 = vmul.f32 %v192, %v193
      %v202 = vsub.f32 %v200, %v201
      %v203 = vand.u32 2147483647, %v192
      %v204 = vsub.f32 0.0, %v203
      %v205 = vmul.f32 %v204, 1.442695
      %v206 = vpow.pop %v205
      %v207 = vadd.f32 %v206, 1.0
      %v208 = vlog2.pop %v207
      %v209 = vmul.f32 %v208, 0.6931472
      %v210 = vmul.f32 -0.5, %v206
      %v211 = vadd.f32 %v210, 1.0
      %v212 = vmul.f32 %v211, %v206
      %v213 = vand.u32 2147483647, %v206
      %vm214 = vcmp.lt.f32.partialorder %v213, 0.0004427343
      %v215 = vsel %vm214, %v212, %v209
      %v216 = vadd.f32 %v202, %v215
      %v217 = vld [vmem:[%s183] sm:$0xff]
      %v218 = vadd.f32 %v196, 0.0
      %v219 = vadd.f32 %v217, %v218
      %220 = vst [vmem:[%s183] sm:$0xff] %v219
      %s221 = scalar_lea.vmem %s183, 8
      %v222 = vld [vmem:[%s221] sm:$0xff]
      %v223 = vadd.f32 %v199, 0.0
      %v224 = vadd.f32 %v222, %v223
      %225 = vst [vmem:[%s221] sm:$0xff] %v224
      %s226 = scalar_lea.vmem %s183, 16
      %v227 = vld [vmem:[%s226] sm:$0xff]
      %v228 = vmul.f32 %v196, %v216
      %v229 = vadd.f32 %v228, 0.0
      %v230 = vadd.f32 %v227, %v229
      %231 = vst [vmem:[%s226] sm:$0xff] %v230
      %s232 = scalar_lea.vmem %s183, 24
      %v233 = vld [vmem:[%s232] sm:$0xff]
      %v234 = vmul.f32 %v199, %v216
      %v235 = vadd.f32 %v234, 0.0
      %v236 = vadd.f32 %v233, %v235
      %237 = vst [vmem:[%s232] sm:$0xff] %v236
      %p238 = scmp.lt.s32.totalorder %s17, 1
      %s239 = scalar_select %p238, %s17, 1
      %s240 = smul.addr %s239, 4
      %s241 = smul.addr %s240, 8
      %s242 = scalar_lea.vmem %s2, %s241
      // Predicated region
      $region33: #{bce_loss.1} parent=27 // pred_check
        %p243 = pneg %p99
      $region34: #{bce_loss.1} parent=27 // pred_check_branch
        %245 = sbr.rel (%p243) target = $region36
      $region35: #{bce_loss.1} parent=27 // pred_region
        _
      $region36: #{bce_loss.1} parent=27 // pred_fallthru
        _
    $region28: #{bce_loss.1} parent=5 // pred_fallthru
      _
    %p246 = scmp.le.s32.totalorder 2, %s8
    // Predicated region
    $region37: #{bce_loss.1} parent=5 // pred_check
      %p247 = pneg %p246
    $region38: #{bce_loss.1} parent=5 // pred_check_branch
      %249 = sbr.rel (%p247) target = $region40
    $region39: #{bce_loss.1} parent=5 // pred_region
      %s250 = ssub.s32 %s8, 2
      // Predicated region
      $region41: #{bce_loss.1} parent=39 // pred_check
        %p251 = pneg %p105
      $region42: #{bce_loss.1} parent=39 // pred_check_branch
        %253 = sbr.rel (%p251) target = $region44
      $region43: #{bce_loss.1} parent=39 // pred_region
        %p254 = scmp.lt.s32.totalorder %s19, 1
        %s255 = scalar_select %p254, %s19, 1
        %s256 = smul.addr %s255, 4
        %s257 = smul.addr %s256, 8
        %s258 = scalar_lea.vmem %s2, %s257
      $region44: #{bce_loss.1} parent=39 // pred_fallthru
        _
    $region40: #{bce_loss.1} parent=5 // pred_fallthru
      _
  $region6: #{bce_loss.1} parent=0 // loop_footer
    %s12 = sadd.s32 1, %s8
  $region7: #{bce_loss.1} parent=0 // loop_footer_branch
    %7 = sbr.rel target = $region3
  $region8: #{bce_loss.1} parent=0 // loop_exit
    _

</llo_original>
